<compile_context>
chip_gen: v7x
topology: tpu7x:2x2x1
jax: 0.10.0
libtpu: 0.0.40
codegen_flags: <defaults>
</compile_context>

<pallas_src>
import math

import jax
import jax.numpy as jnp
from jax import lax
from jax.experimental import pallas as pl
from jax.experimental.pallas import tpu as pltpu


def bert_embedding_kernel(ids_ref, emb_hbm, pos_ref, out_ref, gather_buf, sems):
    # ids_ref    : (B, S)     int32, SMEM (scalar-prefetched token ids)
    # emb_hbm    : (V, E)     f32, raw HBM ref (memory_space=pl.ANY) -> manual DMA gather
    # pos_ref    : (tS, E)    f32, VMEM block of the positional table for this seq tile
    # out_ref    : (1, tS, E) f32, VMEM output block
    # gather_buf : (tS, E)    f32, VMEM scratch receiving gathered embedding rows
    # sems       : (tS,)      DMA semaphores, one per gathered row
    b = pl.program_id(0)
    s = pl.program_id(1)
    tS = gather_buf.shape[0]
    base = s * tS
    unroll = tS <= 32

    # Issue all row-gather DMAs up front so they are in flight concurrently.
    def issue(r, carry):
        tok = ids_ref[b, base + r]
        pltpu.make_async_copy(
            emb_hbm.at[pl.ds(tok, 1)], gather_buf.at[pl.ds(r, 1)], sems.at[r]
        ).start()
        return carry

    lax.fori_loop(0, tS, issue, 0, unroll=unroll)

    # Wait for completion (descriptor only needs matching shape/semaphore).
    def wait(r, carry):
        pltpu.make_async_copy(
            emb_hbm.at[pl.ds(0, 1)], gather_buf.at[pl.ds(r, 1)], sems.at[r]
        ).wait()
        return carry

    lax.fori_loop(0, tS, wait, 0, unroll=unroll)

    # token embedding + positional embedding.
    # TODO(synk): dropout is identity (eval-mode); training-mode dropout would use
    # pltpu.prng_seed / pltpu.prng_random_bits to build a keep mask with 1/(1-p) scaling.
    out_ref[0] = gather_buf[...] + pos_ref[...]


def make_positional_table(max_len, d_model):
    # Matches PositionalEmbedding.__init__ exactly.
    position = jnp.arange(max_len, dtype=jnp.float32)[:, None]                 # (max_len, 1)
    div_term = jnp.exp(
        jnp.arange(0, d_model, 2, dtype=jnp.float32) * -(math.log(10000.0) / d_model)
    )                                                                          # (d_model//2,)
    angles = position * div_term                                               # (max_len, d_model//2)
    pe = jnp.zeros((max_len, d_model), dtype=jnp.float32)
    pe = pe.at[:, 0::2].set(jnp.sin(angles))
    pe = pe.at[:, 1::2].set(jnp.cos(angles))
    return pe


def bert_embedding(sequence, token_emb, pos_table, *, seq_tile=None):
    """sequence: (B, S) int token ids; token_emb: (V, E) f32; pos_table: (max_len, E) f32."""
    B, S = sequence.shape
    V, E = token_emb.shape

    if seq_tile is None:
        seq_tile = S if S <= 256 else 256
    assert S % seq_tile == 0, "seq_tile must divide S"
    assert seq_tile == S or seq_tile % 8 == 0, "seq_tile must be a multiple of 8"

    pos = pos_table[:S]                                     # (S, E) == PositionalEmbedding.forward
    # Clamp ids so a stray out-of-range token can never drive an out-of-bounds HBM DMA
    # (matches JAX's clamping gather semantics for the reference below).
    ids = jnp.clip(sequence.astype(jnp.int32), 0, V - 1)    # (B, S) -> SMEM via scalar prefetch

    grid = (B, S // seq_tile)

    # Purely memory-bound kernel: tell XLA so it schedules neighbors accordingly.
    cost = pl.CostEstimate(
        flops=B * S * E,                                     # the positional add
        transcendentals=0,
        bytes_accessed=B * S * E * 4 * 3 + B * S * 4,        # emb read + pos read + out write + ids
    )

    out = pl.pallas_call(
        bert_embedding_kernel,
        out_shape=jax.ShapeDtypeStruct((B, S, E), jnp.float32),
        grid_spec=pltpu.PrefetchScalarGridSpec(
            num_scalar_prefetch=1,                           # ids -> SMEM
            grid=grid,
            in_specs=[
                pl.BlockSpec(memory_space=pl.ANY),                        # emb stays in HBM
                pl.BlockSpec((seq_tile, E), lambda b, s, ids: (s, 0)),    # pos tile
            ],
            out_specs=pl.BlockSpec((1, seq_tile, E), lambda b, s, ids: (b, s, 0)),
            scratch_shapes=[
                pltpu.VMEM((seq_tile, E), jnp.float32),       # gather buffer
                pltpu.SemaphoreType.DMA((seq_tile,)),         # one sem per gathered row
            ],
        ),
        compiler_params=pltpu.CompilerParams(
            dimension_semantics=("parallel", "parallel"),     # independent (b, s-tile) blocks
            vmem_limit_bytes=32 * 1024 * 1024,
        ),
        cost_estimate=cost,
    )(ids, token_emb, pos)
    return out


if __name__ == "__main__":
    # Small, module-consistent shapes (E chosen lane-dense = 128).
    B, S = 2, 8          # batch, sequence length
    V, E = 64, 128       # vocab_size, embed_size
    MAX_LEN = 512        # PositionalEmbedding default

    key = jax.random.PRNGKey(0)
    k_ids, k_emb = jax.random.split(key)

    # Deterministic "tokenEmb" parameter (replaces the torch.tensor(tokenEmb) weight).
    token_emb = jax.random.normal(k_emb, (V, E), dtype=jnp.float32) * 0.02
    # padding_idx=0 only affects gradients in nn.Embedding; forward just reads the row.

    sequence = jax.random.randint(k_ids, (B, S), 0, V, dtype=jnp.int32)
    pos_table = make_positional_table(MAX_LEN, E)

    out = bert_embedding(sequence, token_emb, pos_table)
    out = jax.block_until_ready(out)

    # Pure-JAX reference: token lookup + positional add (dropout identity / eval mode).
    ref = token_emb[sequence] + pos_table[:S][None, :, :]
    assert out.shape == (B, S, E)
    assert jnp.allclose(out, ref, atol=1e-5, rtol=1e-5), "Pallas result mismatch vs reference"

    print("KERNEL_OK")
</pallas_src>

<mosaic_0001>
module attributes {stable_mosaic.version = 11 : i64} {
  func.func @bert_embedding_kernel(%arg0: i32, %arg1: i32, %arg2: memref<2x8xi32, #tpu.memory_space<smem>>, %arg3: memref<64x128xf32, #tpu.memory_space<any>>, %arg4: memref<8x128xf32, #tpu.memory_space<vmem>>, %arg5: memref<1x8x128xf32, #tpu.memory_space<vmem>>, %arg6: memref<8x128xf32, #tpu.memory_space<vmem>>, %arg7: memref<8x!tpu.dma_semaphore, #tpu.memory_space<semaphore_mem>>) attributes {dimension_semantics = [#tpu.dimension_semantics<parallel>, #tpu.dimension_semantics<parallel>], iteration_bounds = array<i64: 2, 1>, scalar_prefetch = 1 : i64, scratch_operands = 2 : i64, tpu.core_type = #tpu.core_type<tc>, window_params = [{}, {transform_indices = @transform_1, window_bounds = array<i64: 8, 128>}, {transform_indices = @transform_2, window_bounds = array<i64: 1, 8, 128>}]} {
    %c8_i32 = arith.constant 8 : i32
    %0 = arith.muli %arg1, %c8_i32 : i32
    %c0_i32 = arith.constant 0 : i32
    %1 = arith.addi %0, %c0_i32 : i32
    %2 = arith.index_cast %arg0 : i32 to index
    %3 = arith.index_cast %1 : i32 to index
    %4 = memref.load %arg2[%2, %3] : memref<2x8xi32, #tpu.memory_space<smem>>
    %c0_i32_0 = arith.constant 0 : i32
    %5 = tpu.memref_slice %arg3[%4, %c0_i32_0] : memref<64x128xf32, #tpu.memory_space<any>> -> memref<1x128xf32, #tpu.memory_space<any>>
    %c0_i32_1 = arith.constant 0 : i32
    %6 = tpu.memref_slice %arg6[%c0_i32, %c0_i32_1] : memref<8x128xf32, #tpu.memory_space<vmem>> -> memref<1x128xf32, #tpu.memory_space<vmem>>
    %7 = tpu.memref_slice %arg7[%c0_i32] : memref<8x!tpu.dma_semaphore, #tpu.memory_space<semaphore_mem>> -> memref<1x!tpu.dma_semaphore, #tpu.memory_space<semaphore_mem>>
    %8 = tpu.memref_squeeze %7 : memref<1x!tpu.dma_semaphore, #tpu.memory_space<semaphore_mem>> -> memref<!tpu.dma_semaphore, #tpu.memory_space<semaphore_mem>>
    tpu.enqueue_dma source(%5 : memref<1x128xf32, #tpu.memory_space<any>>) target(%6 : memref<1x128xf32, #tpu.memory_space<vmem>>) target_semaphore(%8 : memref<!tpu.dma_semaphore, #tpu.memory_space<semaphore_mem>>)
    %c1_i32 = arith.constant 1 : i32
    %9 = arith.addi %0, %c1_i32 : i32
    %10 = arith.index_cast %arg0 : i32 to index
    %11 = arith.index_cast %9 : i32 to index
    %12 = memref.load %arg2[%10, %11] : memref<2x8xi32, #tpu.memory_space<smem>>
    %c0_i32_2 = arith.constant 0 : i32
    %13 = tpu.memref_slice %arg3[%12, %c0_i32_2] : memref<64x128xf32, #tpu.memory_space<any>> -> memref<1x128xf32, #tpu.memory_space<any>>
    %c0_i32_3 = arith.constant 0 : i32
    %14 = tpu.memref_slice %arg6[%c1_i32, %c0_i32_3] : memref<8x128xf32, #tpu.memory_space<vmem>> -> memref<1x128xf32, #tpu.memory_space<vmem>>
    %15 = tpu.memref_slice %arg7[%c1_i32] : memref<8x!tpu.dma_semaphore, #tpu.memory_space<semaphore_mem>> -> memref<1x!tpu.dma_semaphore, #tpu.memory_space<semaphore_mem>>
    %16 = tpu.memref_squeeze %15 : memref<1x!tpu.dma_semaphore, #tpu.memory_space<semaphore_mem>> -> memref<!tpu.dma_semaphore, #tpu.memory_space<semaphore_mem>>
    tpu.enqueue_dma source(%13 : memref<1x128xf32, #tpu.memory_space<any>>) target(%14 : memref<1x128xf32, #tpu.memory_space<vmem>>) target_semaphore(%16 : memref<!tpu.dma_semaphore, #tpu.memory_space<semaphore_mem>>)
    %c2_i32 = arith.constant 2 : i32
    %17 = arith.addi %0, %c2_i32 : i32
    %18 = arith.index_cast %arg0 : i32 to index
    %19 = arith.index_cast %17 : i32 to index
    %20 = memref.load %arg2[%18, %19] : memref<2x8xi32, #tpu.memory_space<smem>>
    %c0_i32_4 = arith.constant 0 : i32
    %21 = tpu.memref_slice %arg3[%20, %c0_i32_4] : memref<64x128xf32, #tpu.memory_space<any>> -> memref<1x128xf32, #tpu.memory_space<any>>
    %c0_i32_5 = arith.constant 0 : i32
    %22 = tpu.memref_slice %arg6[%c2_i32, %c0_i32_5] : memref<8x128xf32, #tpu.memory_space<vmem>> -> memref<1x128xf32, #tpu.memory_space<vmem>>
    %23 = tpu.memref_slice %arg7[%c2_i32] : memref<8x!tpu.dma_semaphore, #tpu.memory_space<semaphore_mem>> -> memref<1x!tpu.dma_semaphore, #tpu.memory_space<semaphore_mem>>
    %24 = tpu.memref_squeeze %23 : memref<1x!tpu.dma_semaphore, #tpu.memory_space<semaphore_mem>> -> memref<!tpu.dma_semaphore, #tpu.memory_space<semaphore_mem>>
    tpu.enqueue_dma source(%21 : memref<1x128xf32, #tpu.memory_space<any>>) target(%22 : memref<1x128xf32, #tpu.memory_space<vmem>>) target_semaphore(%24 : memref<!tpu.dma_semaphore, #tpu.memory_space<semaphore_mem>>)
    %c3_i32 = arith.constant 3 : i32
    %25 = arith.addi %0, %c3_i32 : i32
    %26 = arith.index_cast %arg0 : i32 to index
    %27 = arith.index_cast %25 : i32 to index
    %28 = memref.load %arg2[%26, %27] : memref<2x8xi32, #tpu.memory_space<smem>>
    %c0_i32_6 = arith.constant 0 : i32
    %29 = tpu.memref_slice %arg3[%28, %c0_i32_6] : memref<64x128xf32, #tpu.memory_space<any>> -> memref<1x128xf32, #tpu.memory_space<any>>
    %c0_i32_7 = arith.constant 0 : i32
    %30 = tpu.memref_slice %arg6[%c3_i32, %c0_i32_7] : memref<8x128xf32, #tpu.memory_space<vmem>> -> memref<1x128xf32, #tpu.memory_space<vmem>>
    %31 = tpu.memref_slice %arg7[%c3_i32] : memref<8x!tpu.dma_semaphore, #tpu.memory_space<semaphore_mem>> -> memref<1x!tpu.dma_semaphore, #tpu.memory_space<semaphore_mem>>
    %32 = tpu.memref_squeeze %31 : memref<1x!tpu.dma_semaphore, #tpu.memory_space<semaphore_mem>> -> memref<!tpu.dma_semaphore, #tpu.memory_space<semaphore_mem>>
    tpu.enqueue_dma source(%29 : memref<1x128xf32, #tpu.memory_space<any>>) target(%30 : memref<1x128xf32, #tpu.memory_space<vmem>>) target_semaphore(%32 : memref<!tpu.dma_semaphore, #tpu.memory_space<semaphore_mem>>)
    %c4_i32 = arith.constant 4 : i32
    %33 = arith.addi %0, %c4_i32 : i32
    %34 = arith.index_cast %arg0 : i32 to index
    %35 = arith.index_cast %33 : i32 to index
    %36 = memref.load %arg2[%34, %35] : memref<2x8xi32, #tpu.memory_space<smem>>
    %c0_i32_8 = arith.constant 0 : i32
    %37 = tpu.memref_slice %arg3[%36, %c0_i32_8] : memref<64x128xf32, #tpu.memory_space<any>> -> memref<1x128xf32, #tpu.memory_space<any>>
    %c0_i32_9 = arith.constant 0 : i32
    %38 = tpu.memref_slice %arg6[%c4_i32, %c0_i32_9] : memref<8x128xf32, #tpu.memory_space<vmem>> -> memref<1x128xf32, #tpu.memory_space<vmem>>
    %39 = tpu.memref_slice %arg7[%c4_i32] : memref<8x!tpu.dma_semaphore, #tpu.memory_space<semaphore_mem>> -> memref<1x!tpu.dma_semaphore, #tpu.memory_space<semaphore_mem>>
    %40 = tpu.memref_squeeze %39 : memref<1x!tpu.dma_semaphore, #tpu.memory_space<semaphore_mem>> -> memref<!tpu.dma_semaphore, #tpu.memory_space<semaphore_mem>>
    tpu.enqueue_dma source(%37 : memref<1x128xf32, #tpu.memory_space<any>>) target(%38 : memref<1x128xf32, #tpu.memory_space<vmem>>) target_semaphore(%40 : memref<!tpu.dma_semaphore, #tpu.memory_space<semaphore_mem>>)
    %c5_i32 = arith.constant 5 : i32
    %41 = arith.addi %0, %c5_i32 : i32
    %42 = arith.index_cast %arg0 : i32 to index
    %43 = arith.index_cast %41 : i32 to index
    %44 = memref.load %arg2[%42, %43] : memref<2x8xi32, #tpu.memory_space<smem>>
    %c0_i32_10 = arith.constant 0 : i32
    %45 = tpu.memref_slice %arg3[%44, %c0_i32_10] : memref<64x128xf32, #tpu.memory_space<any>> -> memref<1x128xf32, #tpu.memory_space<any>>
    %c0_i32_11 = arith.constant 0 : i32
    %46 = tpu.memref_slice %arg6[%c5_i32, %c0_i32_11] : memref<8x128xf32, #tpu.memory_space<vmem>> -> memref<1x128xf32, #tpu.memory_space<vmem>>
    %47 = tpu.memref_slice %arg7[%c5_i32] : memref<8x!tpu.dma_semaphore, #tpu.memory_space<semaphore_mem>> -> memref<1x!tpu.dma_semaphore, #tpu.memory_space<semaphore_mem>>
    %48 = tpu.memref_squeeze %47 : memref<1x!tpu.dma_semaphore, #tpu.memory_space<semaphore_mem>> -> memref<!tpu.dma_semaphore, #tpu.memory_space<semaphore_mem>>
    tpu.enqueue_dma source(%45 : memref<1x128xf32, #tpu.memory_space<any>>) target(%46 : memref<1x128xf32, #tpu.memory_space<vmem>>) target_semaphore(%48 : memref<!tpu.dma_semaphore, #tpu.memory_space<semaphore_mem>>)
    %c6_i32 = arith.constant 6 : i32
    %49 = arith.addi %0, %c6_i32 : i32
    %50 = arith.index_cast %arg0 : i32 to index
    %51 = arith.index_cast %49 : i32 to index
    %52 = memref.load %arg2[%50, %51] : memref<2x8xi32, #tpu.memory_space<smem>>
    %c0_i32_12 = arith.constant 0 : i32
    %53 = tpu.memref_slice %arg3[%52, %c0_i32_12] : memref<64x128xf32, #tpu.memory_space<any>> -> memref<1x128xf32, #tpu.memory_space<any>>
    %c0_i32_13 = arith.constant 0 : i32
    %54 = tpu.memref_slice %arg6[%c6_i32, %c0_i32_13] : memref<8x128xf32, #tpu.memory_space<vmem>> -> memref<1x128xf32, #tpu.memory_space<vmem>>
    %55 = tpu.memref_slice %arg7[%c6_i32] : memref<8x!tpu.dma_semaphore, #tpu.memory_space<semaphore_mem>> -> memref<1x!tpu.dma_semaphore, #tpu.memory_space<semaphore_mem>>
    %56 = tpu.memref_squeeze %55 : memref<1x!tpu.dma_semaphore, #tpu.memory_space<semaphore_mem>> -> memref<!tpu.dma_semaphore, #tpu.memory_space<semaphore_mem>>
    tpu.enqueue_dma source(%53 : memref<1x128xf32, #tpu.memory_space<any>>) target(%54 : memref<1x128xf32, #tpu.memory_space<vmem>>) target_semaphore(%56 : memref<!tpu.dma_semaphore, #tpu.memory_space<semaphore_mem>>)
    %c7_i32 = arith.constant 7 : i32
    %57 = arith.addi %0, %c7_i32 : i32
    %58 = arith.index_cast %arg0 : i32 to index
    %59 = arith.index_cast %57 : i32 to index
    %60 = memref.load %arg2[%58, %59] : memref<2x8xi32, #tpu.memory_space<smem>>
    %c0_i32_14 = arith.constant 0 : i32
    %61 = tpu.memref_slice %arg3[%60, %c0_i32_14] : memref<64x128xf32, #tpu.memory_space<any>> -> memref<1x128xf32, #tpu.memory_space<any>>
    %c0_i32_15 = arith.constant 0 : i32
    %62 = tpu.memref_slice %arg6[%c7_i32, %c0_i32_15] : memref<8x128xf32, #tpu.memory_space<vmem>> -> memref<1x128xf32, #tpu.memory_space<vmem>>
    %63 = tpu.memref_slice %arg7[%c7_i32] : memref<8x!tpu.dma_semaphore, #tpu.memory_space<semaphore_mem>> -> memref<1x!tpu.dma_semaphore, #tpu.memory_space<semaphore_mem>>
    %64 = tpu.memref_squeeze %63 : memref<1x!tpu.dma_semaphore, #tpu.memory_space<semaphore_mem>> -> memref<!tpu.dma_semaphore, #tpu.memory_space<semaphore_mem>>
    tpu.enqueue_dma source(%61 : memref<1x128xf32, #tpu.memory_space<any>>) target(%62 : memref<1x128xf32, #tpu.memory_space<vmem>>) target_semaphore(%64 : memref<!tpu.dma_semaphore, #tpu.memory_space<semaphore_mem>>)
    %c8_i32_16 = arith.constant 8 : i32
    %c0_i32_17 = arith.constant 0 : i32
    %c0_i32_18 = arith.constant 0 : i32
    %c0_i32_19 = arith.constant 0 : i32
    %65 = tpu.memref_slice %arg3[%c0_i32_18, %c0_i32_19] : memref<64x128xf32, #tpu.memory_space<any>> -> memref<1x128xf32, #tpu.memory_space<any>>
    %c0_i32_20 = arith.constant 0 : i32
    %66 = tpu.memref_slice %arg6[%c0_i32_17, %c0_i32_20] : memref<8x128xf32, #tpu.memory_space<vmem>> -> memref<1x128xf32, #tpu.memory_space<vmem>>
    %67 = tpu.memref_slice %arg7[%c0_i32_17] : memref<8x!tpu.dma_semaphore, #tpu.memory_space<semaphore_mem>> -> memref<1x!tpu.dma_semaphore, #tpu.memory_space<semaphore_mem>>
    %68 = tpu.memref_squeeze %67 : memref<1x!tpu.dma_semaphore, #tpu.memory_space<semaphore_mem>> -> memref<!tpu.dma_semaphore, #tpu.memory_space<semaphore_mem>>
    tpu.wait_dma2 semaphore(%68 : memref<!tpu.dma_semaphore, #tpu.memory_space<semaphore_mem>>) src(%65 : memref<1x128xf32, #tpu.memory_space<any>>) dst(%66 : memref<1x128xf32, #tpu.memory_space<vmem>>)
    %c1_i32_21 = arith.constant 1 : i32
    %c0_i32_22 = arith.constant 0 : i32
    %c0_i32_23 = arith.constant 0 : i32
    %69 = tpu.memref_slice %arg3[%c0_i32_22, %c0_i32_23] : memref<64x128xf32, #tpu.memory_space<any>> -> memref<1x128xf32, #tpu.memory_space<any>>
    %c0_i32_24 = arith.constant 0 : i32
    %70 = tpu.memref_slice %arg6[%c1_i32_21, %c0_i32_24] : memref<8x128xf32, #tpu.memory_space<vmem>> -> memref<1x128xf32, #tpu.memory_space<vmem>>
    %71 = tpu.memref_slice %arg7[%c1_i32_21] : memref<8x!tpu.dma_semaphore, #tpu.memory_space<semaphore_mem>> -> memref<1x!tpu.dma_semaphore, #tpu.memory_space<semaphore_mem>>
    %72 = tpu.memref_squeeze %71 : memref<1x!tpu.dma_semaphore, #tpu.memory_space<semaphore_mem>> -> memref<!tpu.dma_semaphore, #tpu.memory_space<semaphore_mem>>
    tpu.wait_dma2 semaphore(%72 : memref<!tpu.dma_semaphore, #tpu.memory_space<semaphore_mem>>) src(%69 : memref<1x128xf32, #tpu.memory_space<any>>) dst(%70 : memref<1x128xf32, #tpu.memory_space<vmem>>)
    %c2_i32_25 = arith.constant 2 : i32
    %c0_i32_26 = arith.constant 0 : i32
    %c0_i32_27 = arith.constant 0 : i32
    %73 = tpu.memref_slice %arg3[%c0_i32_26, %c0_i32_27] : memref<64x128xf32, #tpu.memory_space<any>> -> memref<1x128xf32, #tpu.memory_space<any>>
    %c0_i32_28 = arith.constant 0 : i32
    %74 = tpu.memref_slice %arg6[%c2_i32_25, %c0_i32_28] : memref<8x128xf32, #tpu.memory_space<vmem>> -> memref<1x128xf32, #tpu.memory_space<vmem>>
    %75 = tpu.memref_slice %arg7[%c2_i32_25] : memref<8x!tpu.dma_semaphore, #tpu.memory_space<semaphore_mem>> -> memref<1x!tpu.dma_semaphore, #tpu.memory_space<semaphore_mem>>
    %76 = tpu.memref_squeeze %75 : memref<1x!tpu.dma_semaphore, #tpu.memory_space<semaphore_mem>> -> memref<!tpu.dma_semaphore, #tpu.memory_space<semaphore_mem>>
    tpu.wait_dma2 semaphore(%76 : memref<!tpu.dma_semaphore, #tpu.memory_space<semaphore_mem>>) src(%73 : memref<1x128xf32, #tpu.memory_space<any>>) dst(%74 : memref<1x128xf32, #tpu.memory_space<vmem>>)
    %c3_i32_29 = arith.constant 3 : i32
    %c0_i32_30 = arith.constant 0 : i32
    %c0_i32_31 = arith.constant 0 : i32
    %77 = tpu.memref_slice %arg3[%c0_i32_30, %c0_i32_31] : memref<64x128xf32, #tpu.memory_space<any>> -> memref<1x128xf32, #tpu.memory_space<any>>
    %c0_i32_32 = arith.constant 0 : i32
    %78 = tpu.memref_slice %arg6[%c3_i32_29, %c0_i32_32] : memref<8x128xf32, #tpu.memory_space<vmem>> -> memref<1x128xf32, #tpu.memory_space<vmem>>
    %79 = tpu.memref_slice %arg7[%c3_i32_29] : memref<8x!tpu.dma_semaphore, #tpu.memory_space<semaphore_mem>> -> memref<1x!tpu.dma_semaphore, #tpu.memory_space<semaphore_mem>>
    %80 = tpu.memref_squeeze %79 : memref<1x!tpu.dma_semaphore, #tpu.memory_space<semaphore_mem>> -> memref<!tpu.dma_semaphore, #tpu.memory_space<semaphore_mem>>
    tpu.wait_dma2 semaphore(%80 : memref<!tpu.dma_semaphore, #tpu.memory_space<semaphore_mem>>) src(%77 : memref<1x128xf32, #tpu.memory_space<any>>) dst(%78 : memref<1x128xf32, #tpu.memory_space<vmem>>)
    %c4_i32_33 = arith.constant 4 : i32
    %c0_i32_34 = arith.constant 0 : i32
    %c0_i32_35 = arith.constant 0 : i32
    %81 = tpu.memref_slice %arg3[%c0_i32_34, %c0_i32_35] : memref<64x128xf32, #tpu.memory_space<any>> -> memref<1x128xf32, #tpu.memory_space<any>>
    %c0_i32_36 = arith.constant 0 : i32
    %82 = tpu.memref_slice %arg6[%c4_i32_33, %c0_i32_36] : memref<8x128xf32, #tpu.memory_space<vmem>> -> memref<1x128xf32, #tpu.memory_space<vmem>>
    %83 = tpu.memref_slice %arg7[%c4_i32_33] : memref<8x!tpu.dma_semaphore, #tpu.memory_space<semaphore_mem>> -> memref<1x!tpu.dma_semaphore, #tpu.memory_space<semaphore_mem>>
    %84 = tpu.memref_squeeze %83 : memref<1x!tpu.dma_semaphore, #tpu.memory_space<semaphore_mem>> -> memref<!tpu.dma_semaphore, #tpu.memory_space<semaphore_mem>>
    tpu.wait_dma2 semaphore(%84 : memref<!tpu.dma_semaphore, #tpu.memory_space<semaphore_mem>>) src(%81 : memref<1x128xf32, #tpu.memory_space<any>>) dst(%82 : memref<1x128xf32, #tpu.memory_space<vmem>>)
    %c5_i32_37 = arith.constant 5 : i32
    %c0_i32_38 = arith.constant 0 : i32
    %c0_i32_39 = arith.constant 0 : i32
    %85 = tpu.memref_slice %arg3[%c0_i32_38, %c0_i32_39] : memref<64x128xf32, #tpu.memory_space<any>> -> memref<1x128xf32, #tpu.memory_space<any>>
    %c0_i32_40 = arith.constant 0 : i32
    %86 = tpu.memref_slice %arg6[%c5_i32_37, %c0_i32_40] : memref<8x128xf32, #tpu.memory_space<vmem>> -> memref<1x128xf32, #tpu.memory_space<vmem>>
    %87 = tpu.memref_slice %arg7[%c5_i32_37] : memref<8x!tpu.dma_semaphore, #tpu.memory_space<semaphore_mem>> -> memref<1x!tpu.dma_semaphore, #tpu.memory_space<semaphore_mem>>
    %88 = tpu.memref_squeeze %87 : memref<1x!tpu.dma_semaphore, #tpu.memory_space<semaphore_mem>> -> memref<!tpu.dma_semaphore, #tpu.memory_space<semaphore_mem>>
    tpu.wait_dma2 semaphore(%88 : memref<!tpu.dma_semaphore, #tpu.memory_space<semaphore_mem>>) src(%85 : memref<1x128xf32, #tpu.memory_space<any>>) dst(%86 : memref<1x128xf32, #tpu.memory_space<vmem>>)
    %c6_i32_41 = arith.constant 6 : i32
    %c0_i32_42 = arith.constant 0 : i32
    %c0_i32_43 = arith.constant 0 : i32
    %89 = tpu.memref_slice %arg3[%c0_i32_42, %c0_i32_43] : memref<64x128xf32, #tpu.memory_space<any>> -> memref<1x128xf32, #tpu.memory_space<any>>
    %c0_i32_44 = arith.constant 0 : i32
    %90 = tpu.memref_slice %arg6[%c6_i32_41, %c0_i32_44] : memref<8x128xf32, #tpu.memory_space<vmem>> -> memref<1x128xf32, #tpu.memory_space<vmem>>
    %91 = tpu.memref_slice %arg7[%c6_i32_41] : memref<8x!tpu.dma_semaphore, #tpu.memory_space<semaphore_mem>> -> memref<1x!tpu.dma_semaphore, #tpu.memory_space<semaphore_mem>>
    %92 = tpu.memref_squeeze %91 : memref<1x!tpu.dma_semaphore, #tpu.memory_space<semaphore_mem>> -> memref<!tpu.dma_semaphore, #tpu.memory_space<semaphore_mem>>
    tpu.wait_dma2 semaphore(%92 : memref<!tpu.dma_semaphore, #tpu.memory_space<semaphore_mem>>) src(%89 : memref<1x128xf32, #tpu.memory_space<any>>) dst(%90 : memref<1x128xf32, #tpu.memory_space<vmem>>)
    %c7_i32_45 = arith.constant 7 : i32
    %c0_i32_46 = arith.constant 0 : i32
    %c0_i32_47 = arith.constant 0 : i32
    %93 = tpu.memref_slice %arg3[%c0_i32_46, %c0_i32_47] : memref<64x128xf32, #tpu.memory_space<any>> -> memref<1x128xf32, #tpu.memory_space<any>>
    %c0_i32_48 = arith.constant 0 : i32
    %94 = tpu.memref_slice %arg6[%c7_i32_45, %c0_i32_48] : memref<8x128xf32, #tpu.memory_space<vmem>> -> memref<1x128xf32, #tpu.memory_space<vmem>>
    %95 = tpu.memref_slice %arg7[%c7_i32_45] : memref<8x!tpu.dma_semaphore, #tpu.memory_space<semaphore_mem>> -> memref<1x!tpu.dma_semaphore, #tpu.memory_space<semaphore_mem>>
    %96 = tpu.memref_squeeze %95 : memref<1x!tpu.dma_semaphore, #tpu.memory_space<semaphore_mem>> -> memref<!tpu.dma_semaphore, #tpu.memory_space<semaphore_mem>>
    tpu.wait_dma2 semaphore(%96 : memref<!tpu.dma_semaphore, #tpu.memory_space<semaphore_mem>>) src(%93 : memref<1x128xf32, #tpu.memory_space<any>>) dst(%94 : memref<1x128xf32, #tpu.memory_space<vmem>>)
    %c8_i32_49 = arith.constant 8 : i32
    %c0 = arith.constant 0 : index
    %c0_50 = arith.constant 0 : index
    %97 = vector.load %arg6[%c0, %c0_50] : memref<8x128xf32, #tpu.memory_space<vmem>>, vector<8x128xf32>
    %c0_51 = arith.constant 0 : index
    %c0_52 = arith.constant 0 : index
    %98 = vector.load %arg4[%c0_51, %c0_52] : memref<8x128xf32, #tpu.memory_space<vmem>>, vector<8x128xf32>
    %99 = arith.addf %97, %98 : vector<8x128xf32>
    %c0_53 = arith.constant 0 : index
    %c0_54 = arith.constant 0 : index
    %c0_55 = arith.constant 0 : index
    %100 = vector.load %arg5[%c0_53, %c0_54, %c0_55] : memref<1x8x128xf32, #tpu.memory_space<vmem>>, vector<1x8x128xf32>
    %101 = vector.shape_cast %100 : vector<1x8x128xf32> to vector<8x128xf32>
    %102 = vector.shape_cast %99 : vector<8x128xf32> to vector<1x8x128xf32>
    tpu.vector_store %arg5[%c0_53, %c0_54, %c0_55], %102 {strides = array<i32>} : memref<1x8x128xf32, #tpu.memory_space<vmem>>, vector<1x8x128xf32>,
    return
  }
  func.func @transform_1(%arg0: i32, %arg1: i32, %arg2: memref<2x8xi32, #tpu.memory_space<smem>>) -> (i32, i32) {
    %c0_i32 = arith.constant 0 : i32
    %c0_i32_0 = arith.constant 0 : i32
    return %arg1, %c0_i32 : i32, i32
  }
  func.func @transform_2(%arg0: i32, %arg1: i32, %arg2: memref<2x8xi32, #tpu.memory_space<smem>>) -> (i32, i32, i32) {
    %c0_i32 = arith.constant 0 : i32
    %c0_i32_0 = arith.constant 0 : i32
    return %arg0, %arg1, %c0_i32 : i32, i32, i32
  }
}

</mosaic_0001>

<llo_original>
// kernel: tpu_custom_call.1
$region0: #{tpu_custom_call.1}
  #allocation0 [shape = 'u32[]', space=smem, size = 0x4, offset = 0x4, fixed_abs, tag = 'smem constant byte address 0x4 - core index']
  #allocation1 [shape = 'u32[144,128]{1,0:T(1,128)}', space=vmem, size = 0x12000, scoped, tag = 'internal scratch']
  #allocation2 [shape = 'f32[8,128]{1,0:T(8,128)}', space=vmem, size = 0x1000, scoped, tag = 'scratch operand']
  #allocation3 [shape = 's32[8]{0}', space=sflag, size = 0x20, scoped, tag = 'scratch operand']
  #allocation4 [shape = 's32[1]{0}', space=sflag, size = 0x4, scoped, tag = 'scoped memory for tpu_custom_call.1']
  #allocation5 [shape = 'u8[1024]{0}', space=smem, size = 0x400, scoped, tag = 'prefetched SMEM operand 0']
  #allocation10 [shape = 's32[]', space=sflag, size = 0x4, offset = 0, fixed_abs, tag = 'sflag constant byte address 0x0 - dummy sync flag']
  #allocation11 [shape = 's32[]', space=sflag, size = 0x4, offset = 0, fixed_abs, tag = 'sflag constant byte address 0x0 - dummy sync flag']
  #allocation12 [shape = 'u32[]', space=smem, size = 0x4, offset = 0x44, fixed_abs, tag = 'smem constant byte address 0x44 - assertion arg 0']
  #allocation13 [shape = 'u32[]', space=smem, size = 0x4, offset = 0x48, fixed_abs, tag = 'smem constant byte address 0x48 - assertion arg 1']
  #allocation14 [shape = 's32[]', space=sflag, size = 0x4, offset = 0, fixed_abs, tag = 'sflag constant byte address 0x0 - dummy sync flag']
  #allocation15 [shape = 's32[]', space=sflag, size = 0x4, offset = 0, fixed_abs, tag = 'sflag constant byte address 0x0 - dummy sync flag']
  #allocation16 [shape = 's32[]', space=sflag, size = 0x4, offset = 0, fixed_abs, tag = 'sflag constant byte address 0x0 - dummy sync flag']
  #allocation17 [shape = 's32[]', space=sflag, size = 0x4, offset = 0, fixed_abs, tag = 'sflag constant byte address 0x0 - dummy sync flag']
  #allocation18 [shape = 's32[]', space=sflag, size = 0x4, offset = 0, fixed_abs, tag = 'sflag constant byte address 0x0 - dummy sync flag']
  #allocation19 [shape = 's32[]', space=sflag, size = 0x4, offset = 0, fixed_abs, tag = 'sflag constant byte address 0x0 - dummy sync flag']
  #allocation20 [shape = 's32[]', space=sflag, size = 0x4, offset = 0, fixed_abs, tag = 'sflag constant byte address 0x0 - dummy sync flag']
  #allocation21 [shape = 's32[]', space=sflag, size = 0x4, offset = 0, fixed_abs, tag = 'sflag constant byte address 0x0 - dummy sync flag']
  #allocation22 [shape = 's32[]', space=sflag, size = 0x4, offset = 0, fixed_abs, tag = 'sflag constant byte address 0x0 - dummy sync flag']
  #allocation23 [shape = 's32[]', space=sflag, size = 0x4, offset = 0, fixed_abs, tag = 'sflag constant byte address 0x0 - dummy sync flag']
  #allocation24 [shape = 's32[]', space=sflag, size = 0x4, offset = 0, fixed_abs, tag = 'sflag constant byte address 0x0 - dummy sync flag']
  #allocation25 [shape = 's32[]', space=sflag, size = 0x4, offset = 0, fixed_abs, tag = 'sflag constant byte address 0x0 - dummy sync flag']
  #allocation26 [shape = 's32[]', space=sflag, size = 0x4, offset = 0, fixed_abs, tag = 'sflag constant byte address 0x0 - dummy sync flag']
  #allocation27 [shape = 's32[]', space=sflag, size = 0x4, offset = 0, fixed_abs, tag = 'sflag constant byte address 0x0 - dummy sync flag']
  %s0 = inlined_call_operand.hbm [shape: s32[2,8], index: 0, kind: input, shape index: {}]
  %s1 = inlined_call_operand.hbm [shape: f32[64,128], index: 1, kind: input, shape index: {}]
  %s2 = inlined_call_operand.hbm [shape: f32[8,128], index: 2, kind: input, shape index: {}]
  %s3 = inlined_call_operand.hbm [shape: f32[2,8,128], index: 3, kind: output, shape index: {}]
  %s4 = sld [smem:[#allocation0]]
  $region73: #{tpu_custom_call.1} parent=0
    _
  %s6 = ssub.s32 1, %s4
  %s7 = scalar_select 0, %s6, %s4
  %9 = dma.hbm_to_smem %s0, 32, [#allocation5], [#allocation4]
  %10 = dma.done [#allocation4], 32
  %11 = sfence
  $region1: #{tpu_custom_call.1} parent=0
    #allocation6 [shape = 'u8[4096]{0}', space=vmem, size = 0x1000, scoped, tag = 'input window, operand 2, single buffered']
    #allocation7 [shape = 's32[2]{0}', space=sflag, size = 0x8, scoped, tag = 'scoped memory for tpu_custom_call.1']
    #allocation8 [shape = 's32[2]{0}', space=sflag, size = 0x8, scoped, tag = 'scoped memory for tpu_custom_call.1']
    #allocation9 [shape = 'u8[8192]{0}', space=vmem, size = 0x2000, scoped, tag = 'output window, operand 0']
    %12 = vsyncpa [#allocation7], 0
    %13 = vsyncpa [#allocation8], 0
    %s14 = scalar_lea.sflag [#allocation8], 1
    %15 = vsyncpa %s14, 0
    loop: start=0, step=1, limit=4
    $region2: #{tpu_custom_call.1} parent=1 // loop_pre_header
      _
    $region3: #{tpu_custom_call.1} parent=1 // loop_header
      %s17 = sphi 0, %s21
      %p18 = scmp.ge.s32.totalorder %s17, 4
      %s24 = sphi 0, %s36
      %s25 = sphi 0, %s32
      %s26 = sphi 0, %s24
      %s27 = sphi 0, %s25
      %s28 = sphi 0, %s26
      %s29 = sphi 0, %s27
      %s39 = sphi 0, %s41
      %s42 = sphi 0, %s39
      %s43 = sphi 0, %s42
      %s59 = sphi 0, %s43
      %s67 = sphi 0, %s69
      %s70 = sphi 0, %s67
      %s71 = sphi 0, %s70
      %s87 = sphi 0, %s71
    $region4: #{tpu_custom_call.1} parent=1 // loop_header_branch
      %20 = sbr.rel (%p18) target = $region8
    $region5: #{tpu_custom_call.1} parent=1 // loop_body
      %s22 = ssub.s32 %s17, 1
      %s23 = ssub.s32 %s17, 2
      %s30 = sadd.s32 1, %s25
      %p31 = scmp.ge.s32.totalorder %s30, 1
      %s32 = scalar_select %p31, 0, %s30
      %s33 = sadd.s32 1, %s24
      %s34 = scalar_select %p31, %s33, %s24
      %p35 = scmp.ge.s32.totalorder %s34, 2
      %s36 = scalar_select %p35, 0, %s34
      %s37 = ssub.s32 %s25, %s32
      %p38 = scmp.eq.s32.totalorder %s37, 0
      %s40 = sadd.s32 %s39, 1
      %s41 = scalar_select %p38, %s39, %s40
      %p44 = pneg %p38
      %p45 = scmp.eq.s32.totalorder %s17, 1
      %p46 = por %p44, %p45
      %p47 = scmp.ne.s32.totalorder %s39, %s42
      %p48 = scmp.eq.s32.totalorder %s17, 0
      %p49 = por %p47, %p48
      %p50 = scmp.ne.s32.totalorder %s39, %s42
      %p51 = scmp.eq.s32.totalorder %s22, 1
      %p52 = por %p50, %p51
      %p53 = scmp.ne.s32.totalorder %s42, %s43
      %p54 = scmp.eq.s32.totalorder %s22, 0
      %p55 = por %p53, %p54
      %p56 = scmp.ne.s32.totalorder %s42, %s43
      %p57 = scmp.eq.s32.totalorder %s23, 1
      %p58 = por %p56, %p57
      %p60 = scmp.ne.s32.totalorder %s43, %s59
      %p61 = scmp.eq.s32.totalorder %s23, 0
      %p62 = por %p60, %p61
      %s63 = ssub.s32 %s24, %s36
      %s64 = ssub.s32 %s25, %s32
      %s65 = sor.u32 %s63, %s64
      %p66 = scmp.eq.s32.totalorder %s65, 0
      %s68 = sadd.s32 %s67, 1
      %s69 = scalar_select %p66, %s67, %s68
      %p72 = pneg %p66
      %p73 = scmp.eq.s32.totalorder %s17, 1
      %p74 = por %p72, %p73
      %p75 = scmp.ne.s32.totalorder %s67, %s70
      %p76 = scmp.eq.s32.totalorder %s17, 0
      %p77 = por %p75, %p76
      %p78 = scmp.ne.s32.totalorder %s67, %s70
      %p79 = scmp.eq.s32.totalorder %s22, 1
      %p80 = por %p78, %p79
      %p81 = scmp.ne.s32.totalorder %s70, %s71
      %p82 = scmp.eq.s32.totalorder %s22, 0
      %p83 = por %p81, %p82
      %p84 = scmp.ne.s32.totalorder %s70, %s71
      %p85 = scmp.eq.s32.totalorder %s23, 1
      %p86 = por %p84, %p85
      %p88 = scmp.ne.s32.totalorder %s71, %s87
      %p89 = scmp.eq.s32.totalorder %s23, 0
      %p90 = por %p88, %p89
      %p91 = scmp.le.s32.totalorder 1, %s17
      %p92 = scmp.lt.s32.totalorder %s17, 3
      %p93 = pnand %p91, %p92
      %p94 = pneg %p93
      // Predicated region
      $region9: #{tpu_custom_call.1} parent=5 // pred_check
        _
      $region10: #{tpu_custom_call.1} parent=5 // pred_check_branch
        %96 = sbr.rel (%p93) target = $region12
      $region11: #{tpu_custom_call.1} parent=5 // pred_region
        %s97 = ssub.s32 %s17, 1
        // Predicated region
        $region13: #{tpu_custom_call.1} parent=11 // pred_check
          %p98 = pneg %p55
        $region14: #{tpu_custom_call.1} parent=11 // pred_check_branch
          %100 = sbr.rel (%p98) target = $region16
        $region15: #{tpu_custom_call.1} parent=11 // pred_region
          %s102 = ssub.s32 128, 128
          %103 = vsyncadd [#allocation7], %s102
          %s104 = smul.addr %s27, 128
          %s105 = scalar_lea.hbm %s2, %s104
          %s107 = sshll.u32 [#allocation6], 4
          %s108 = int_to_ptr.vmem [resolvable:$true] %s107
          %110 = dma.hbm_to_vmem [thread:$0]  %s105, 128, %s108, [#allocation7]
        $region16: #{tpu_custom_call.1} parent=11 // pred_fallthru
          _
      $region12: #{tpu_custom_call.1} parent=5 // pred_fallthru
        _
      %p111 = scmp.lt.s32.totalorder %s17, 2
      // Predicated region
      $region17: #{tpu_custom_call.1} parent=5 // pred_check
        %p112 = pneg %p111
      $region18: #{tpu_custom_call.1} parent=5 // pred_check_branch
        %114 = sbr.rel (%p112) target = $region20
      $region19: #{tpu_custom_call.1} parent=5 // pred_region
        _
      $region20: #{tpu_custom_call.1} parent=5 // pred_fallthru
        _
      %p115 = scmp.le.s32.totalorder 1, %s17
      %p116 = scmp.lt.s32.totalorder %s17, 3
      %p117 = pnand %p115, %p116
      %p118 = pneg %p117
      // Predicated region
      $region21: #{tpu_custom_call.1} parent=5 // pred_check
        _
      $region22: #{tpu_custom_call.1} parent=5 // pred_check_branch
        %120 = sbr.rel (%p117) target = $region24
      $region23: #{tpu_custom_call.1} parent=5 // pred_region
        %s121 = ssub.s32 %s17, 1
        // Predicated region
        $region25: #{tpu_custom_call.1} parent=23 // pred_check
          %p122 = pneg %p55
        $region26: #{tpu_custom_call.1} parent=23 // pred_check_branch
          %124 = sbr.rel (%p122) target = $region28
        $region27: #{tpu_custom_call.1} parent=23 // pred_region
          %125 = dma.done [#allocation7], 128
        $region28: #{tpu_custom_call.1} parent=23 // pred_fallthru
          _
        %p126 = pneg %p55
        %p127 = pneg %p52
        %p128 = pneg %p83
        %p129 = pneg %p80
        %s130 = sand.u32 %s70, 1
        %s131 = scalar_lea.sflag [#allocation8], %s130
        %s132 = sand.u32 %s70, 1
        %s133 = smul.addr %s132, 8
        %s134 = scalar_lea.vmem [#allocation9], %s133
        %s135 = smul.u32 %s27, 8
        %s136 = sshra.s32 %s135, 7
        %s137 = sand.u32 %s135, 127
        %s138 = sadd.s32 %s136, %s26
        %s139 = smul.u32 %s138, 128
        %s140 = sshra.s32 %s135, 7
        %s141 = sand.u32 %s135, 127
        %s142 = sadd.s32 %s139, %s141
        %s143 = sld [smem:[#allocation5 + %s142]]
        %s144 = smul.addr %s143, 16
        %s145 = scalar_lea.hbm %s1, %s144
        // Predicated region
        $region29: #{tpu_custom_call.1} parent=23 // pred_check
          _
        $region30: #{tpu_custom_call.1} parent=23 // pred_check_branch
          %147 = sbr.rel target = $region32
        $region31: #{tpu_custom_call.1} parent=23 // pred_region
          %148 = sst [smem:[#allocation12]] [#allocation11]
          %149 = sst [smem:[#allocation13]] [#allocation10]
        $region32: #{tpu_custom_call.1} parent=23 // pred_fallthru
          _
        %151 = shalt.err (0)
        %s153 = sshll.u32 [#allocation2], 4
        %s154 = int_to_ptr.vmem [resolvable:$true] %s153
        %156 = dma.hbm_to_vmem [thread:$0]  %s145, 16, %s154, [#allocation3]
        %s157 = sadd.s32 %s135, 1
        %s158 = sshra.s32 %s157, 7
        %s159 = sand.u32 %s157, 127
        %s160 = sadd.s32 %s158, %s26
        %s161 = smul.u32 %s160, 128
        %s162 = sshra.s32 %s157, 7
        %s163 = sand.u32 %s157, 127
        %s164 = sadd.s32 %s161, %s163
        %s165 = sld [smem:[#allocation5 + %s164]]
        %s166 = smul.addr %s165, 16
        %s167 = scalar_lea.hbm %s1, %s166
        %s168 = scalar_lea.vmem [#allocation2], 1
        %s169 = scalar_lea.sflag [#allocation3], 1
        // Predicated region
        $region33: #{tpu_custom_call.1} parent=23 // pred_check
          _
        $region34: #{tpu_custom_call.1} parent=23 // pred_check_branch
          %171 = sbr.rel target = $region36
        $region35: #{tpu_custom_call.1} parent=23 // pred_region
          %172 = sst [smem:[#allocation12]] [#allocation15]
          %173 = sst [smem:[#allocation13]] [#allocation14]
        $region36: #{tpu_custom_call.1} parent=23 // pred_fallthru
          _
        %175 = shalt.err (0)
        %s177 = sshll.u32 %s168, 4
        %s178 = int_to_ptr.vmem [resolvable:$true] %s177
        %180 = dma.hbm_to_vmem [thread:$0]  %s167, 16, %s178, %s169
        %s181 = sadd.s32 %s135, 2
        %s182 = sshra.s32 %s181, 7
        %s183 = sand.u32 %s181, 127
        %s184 = sadd.s32 %s182, %s26
        %s185 = smul.u32 %s184, 128
        %s186 = sshra.s32 %s181, 7
        %s187 = sand.u32 %s181, 127
        %s188 = sadd.s32 %s185, %s187
        %s189 = sld [smem:[#allocation5 + %s188]]
        %s190 = smul.addr %s189, 16
        %s191 = scalar_lea.hbm %s1, %s190
        %s192 = scalar_lea.vmem [#allocation2], 2
        %s193 = scalar_lea.sflag [#allocation3], 2
        // Predicated region
        $region37: #{tpu_custom_call.1} parent=23 // pred_check
          _
        $region38: #{tpu_custom_call.1} parent=23 // pred_check_branch
          %195 = sbr.rel target = $region40
        $region39: #{tpu_custom_call.1} parent=23 // pred_region
          %196 = sst [smem:[#allocation12]] [#allocation17]
          %197 = sst [smem:[#allocation13]] [#allocation16]
        $region40: #{tpu_custom_call.1} parent=23 // pred_fallthru
          _
        %199 = shalt.err (0)
        %s201 = sshll.u32 %s192, 4
        %s202 = int_to_ptr.vmem [resolvable:$true] %s201
        %204 = dma.hbm_to_vmem [thread:$0]  %s191, 16, %s202, %s193
        %s205 = sadd.s32 %s135, 3
        %s206 = sshra.s32 %s205, 7
        %s207 = sand.u32 %s205, 127
        %s208 = sadd.s32 %s206, %s26
        %s209 = smul.u32 %s208, 128
        %s210 = sshra.s32 %s205, 7
        %s211 = sand.u32 %s205, 127
        %s212 = sadd.s32 %s209, %s211
        %s213 = sld [smem:[#allocation5 + %s212]]
        %s214 = smul.addr %s213, 16
        %s215 = scalar_lea.hbm %s1, %s214
        %s216 = scalar_lea.vmem [#allocation2], 3
        %s217 = scalar_lea.sflag [#allocation3], 3
        // Predicated region
        $region41: #{tpu_custom_call.1} parent=23 // pred_check
          _
        $region42: #{tpu_custom_call.1} parent=23 // pred_check_branch
          %219 = sbr.rel target = $region44
        $region43: #{tpu_custom_call.1} parent=23 // pred_region
          %220 = sst [smem:[#allocation12]] [#allocation19]
          %221 = sst [smem:[#allocation13]] [#allocation18]
        $region44: #{tpu_custom_call.1} parent=23 // pred_fallthru
          _
        %223 = shalt.err (0)
        %s225 = sshll.u32 %s216, 4
        %s226 = int_to_ptr.vmem [resolvable:$true] %s225
        %228 = dma.hbm_to_vmem [thread:$0]  %s215, 16, %s226, %s217
        %s229 = sadd.s32 %s135, 4
        %s230 = sshra.s32 %s229, 7
        %s231 = sand.u32 %s229, 127
        %s232 = sadd.s32 %s230, %s26
        %s233 = smul.u32 %s232, 128
        %s234 = sshra.s32 %s229, 7
        %s235 = sand.u32 %s229, 127
        %s236 = sadd.s32 %s233, %s235
        %s237 = sld [smem:[#allocation5 + %s236]]
        %s238 = smul.addr %s237, 16
        %s239 = scalar_lea.hbm %s1, %s238
        %s240 = scalar_lea.vmem [#allocation2], 4
        %s241 = scalar_lea.sflag [#allocation3], 4
        // Predicated region
        $region45: #{tpu_custom_call.1} parent=23 // pred_check
          _
        $region46: #{tpu_custom_call.1} parent=23 // pred_check_branch
          %243 = sbr.rel target = $region48
        $region47: #{tpu_custom_call.1} parent=23 // pred_region
          %244 = sst [smem:[#allocation12]] [#allocation21]
          %245 = sst [smem:[#allocation13]] [#allocation20]
        $region48: #{tpu_custom_call.1} parent=23 // pred_fallthru
          _
        %247 = shalt.err (0)
        %s249 = sshll.u32 %s240, 4
        %s250 = int_to_ptr.vmem [resolvable:$true] %s249
        %252 = dma.hbm_to_vmem [thread:$0]  %s239, 16, %s250, %s241
        %s253 = sadd.s32 %s135, 5
        %s254 = sshra.s32 %s253, 7
        %s255 = sand.u32 %s253, 127
        %s256 = sadd.s32 %s254, %s26
        %s257 = smul.u32 %s256, 128
        %s258 = sshra.s32 %s253, 7
        %s259 = sand.u32 %s253, 127
        %s260 = sadd.s32 %s257, %s259
        %s261 = sld [smem:[#allocation5 + %s260]]
        %s262 = smul.addr %s261, 16
        %s263 = scalar_lea.hbm %s1, %s262
        %s264 = scalar_lea.vmem [#allocation2], 5
        %s265 = scalar_lea.sflag [#allocation3], 5
        // Predicated region
        $region49: #{tpu_custom_call.1} parent=23 // pred_check
          _
        $region50: #{tpu_custom_call.1} parent=23 // pred_check_branch
          %267 = sbr.rel target = $region52
        $region51: #{tpu_custom_call.1} parent=23 // pred_region
          %268 = sst [smem:[#allocation12]] [#allocation23]
          %269 = sst [smem:[#allocation13]] [#allocation22]
        $region52: #{tpu_custom_call.1} parent=23 // pred_fallthru
          _
        %271 = shalt.err (0)
        %s273 = sshll.u32 %s264, 4
        %s274 = int_to_ptr.vmem [resolvable:$true] %s273
        %276 = dma.hbm_to_vmem [thread:$0]  %s263, 16, %s274, %s265
        %s277 = sadd.s32 %s135, 6
        %s278 = sshra.s32 %s277, 7
        %s279 = sand.u32 %s277, 127
        %s280 = sadd.s32 %s278, %s26
        %s281 = smul.u32 %s280, 128
        %s282 = sshra.s32 %s277, 7
        %s283 = sand.u32 %s277, 127
        %s284 = sadd.s32 %s281, %s283
        %s285 = sld [smem:[#allocation5 + %s284]]
        %s286 = smul.addr %s285, 16
        %s287 = scalar_lea.hbm %s1, %s286
        %s288 = scalar_lea.vmem [#allocation2], 6
        %s289 = scalar_lea.sflag [#allocation3], 6
        // Predicated region
        $region53: #{tpu_custom_call.1} parent=23 // pred_check
          _
        $region54: #{tpu_custom_call.1} parent=23 // pred_check_branch
          %291 = sbr.rel target = $region56
        $region55: #{tpu_custom_call.1} parent=23 // pred_region
          %292 = sst [smem:[#allocation12]] [#allocation25]
          %293 = sst [smem:[#allocation13]] [#allocation24]
        $region56: #{tpu_custom_call.1} parent=23 // pred_fallthru
          _
        %295 = shalt.err (0)
        %s297 = sshll.u32 %s288, 4
        %s298 = int_to_ptr.vmem [resolvable:$true] %s297
        %300 = dma.hbm_to_vmem [thread:$0]  %s287, 16, %s298, %s289
        %s301 = sadd.s32 %s135, 7
        %s302 = sshra.s32 %s301, 7
        %s303 = sand.u32 %s301, 127
        %s304 = sadd.s32 %s302, %s26
        %s305 = smul.u32 %s304, 128
        %s306 = sshra.s32 %s301, 7
        %s307 = sand.u32 %s301, 127
        %s308 = sadd.s32 %s305, %s307
        %s309 = sld [smem:[#allocation5 + %s308]]
        %s310 = smul.addr %s309, 16
        %s311 = scalar_lea.hbm %s1, %s310
        %s312 = scalar_lea.vmem [#allocation2], 7
        %s313 = scalar_lea.sflag [#allocation3], 7
        // Predicated region
        $region57: #{tpu_custom_call.1} parent=23 // pred_check
          _
        $region58: #{tpu_custom_call.1} parent=23 // pred_check_branch
          %315 = sbr.rel target = $region60
        $region59: #{tpu_custom_call.1} parent=23 // pred_region
          %316 = sst [smem:[#allocation12]] [#allocation27]
          %317 = sst [smem:[#allocation13]] [#allocation26]
        $region60: #{tpu_custom_call.1} parent=23 // pred_fallthru
          _
        %319 = shalt.err (0)
        %s321 = sshll.u32 %s312, 4
        %s322 = int_to_ptr.vmem [resolvable:$true] %s321
        %324 = dma.hbm_to_vmem [thread:$0]  %s311, 16, %s322, %s313
        %s325 = smul.u32 1, 1
        %s326 = sshll.u32 %s325, 4
        %327 = dma.done [#allocation3], %s326
        %s328 = sshll.u32 %s325, 4
        %329 = dma.done %s169, %s328
        %s330 = sshll.u32 %s325, 4
        %331 = dma.done %s193, %s330
        %s332 = sshll.u32 %s325, 4
        %333 = dma.done %s217, %s332
        %s334 = sshll.u32 %s325, 4
        %335 = dma.done %s241, %s334
        %s336 = sshll.u32 %s325, 4
        %337 = dma.done %s265, %s336
        %s338 = sshll.u32 %s325, 4
        %339 = dma.done %s289, %s338
        %s340 = sshll.u32 %s325, 4
        %341 = dma.done %s313, %s340
        %v342 = vld [vmem:[#allocation2] sm:$0xff]
        %v343 = vld [vmem:[#allocation6] sm:$0xff]
        %v344 = vadd.f32 %v342, %v343
        %345 = vst [vmem:[%s134] sm:$0xff] %v344
        %s346 = sand.u32 %s70, 1
        %s347 = scalar_lea.sflag [#allocation8], %s346
        %s348 = sand.u32 %s70, 1
        %s349 = smul.addr %s348, 8
        %s350 = scalar_lea.vmem [#allocation9], %s349
        // Predicated region
        $region61: #{tpu_custom_call.1} parent=23 // pred_check
          %p351 = pneg %p80
        $region62: #{tpu_custom_call.1} parent=23 // pred_check_branch
          %353 = sbr.rel (%p351) target = $region64
        $region63: #{tpu_custom_call.1} parent=23 // pred_region
          %s355 = ssub.s32 128, 128
          %356 = vsyncadd %s347, %s355
          %s357 = sadd.s32 %s27, %s26
          %s358 = smul.addr %s357, 128
          %s359 = scalar_lea.hbm %s3, %s358
          %s361 = sshll.u32 %s350, 4
          %s362 = int_to_ptr.vmem [resolvable:$true] %s361
          %364 = dma.vmem_to_hbm [thread:$0]  %s362, 128, %s359, %s347
        $region64: #{tpu_custom_call.1} parent=23 // pred_fallthru
          _
      $region24: #{tpu_custom_call.1} parent=5 // pred_fallthru
        _
      %p365 = scmp.le.s32.totalorder 2, %s17
      // Predicated region
      $region65: #{tpu_custom_call.1} parent=5 // pred_check
        %p366 = pneg %p365
      $region66: #{tpu_custom_call.1} parent=5 // pred_check_branch
        %368 = sbr.rel (%p366) target = $region68
      $region67: #{tpu_custom_call.1} parent=5 // pred_region
        %s369 = ssub.s32 %s17, 2
        // Predicated region
        $region69: #{tpu_custom_call.1} parent=67 // pred_check
          %p370 = pneg %p86
        $region70: #{tpu_custom_call.1} parent=67 // pred_check_branch
          %372 = sbr.rel (%p370) target = $region72
        $region71: #{tpu_custom_call.1} parent=67 // pred_region
          %s373 = sand.u32 %s71, 1
          %s374 = scalar_lea.sflag [#allocation8], %s373
          %s375 = sand.u32 %s71, 1
          %s376 = smul.addr %s375, 8
          %s377 = scalar_lea.vmem [#allocation9], %s376
          %378 = dma.done %s374, 128
        $region72: #{tpu_custom_call.1} parent=67 // pred_fallthru
          _
      $region68: #{tpu_custom_call.1} parent=5 // pred_fallthru
        _
    $region6: #{tpu_custom_call.1} parent=1 // loop_footer
      %s21 = sadd.s32 1, %s17
    $region7: #{tpu_custom_call.1} parent=1 // loop_footer_branch
      %16 = sbr.rel target = $region3
    $region8: #{tpu_custom_call.1} parent=1 // loop_exit
      _
    %379 = vsyncpa [#allocation7], 1
    %s380 = scalar_lea.sflag [#allocation7], 1
    %381 = vsyncpa %s380, 1
    %382 = vsyncpa [#allocation8], 1
    %s383 = scalar_lea.sflag [#allocation8], 1
    %384 = vsyncpa %s383, 1
  %385 = vsyncmov [#allocation3]
  %s386 = vpop.sfrf %385
  %p387 = scmp.eq.s32.totalorder %s386, 0
  %p388 = pneg %p387
  %390 = shalt.err (%p388)
  %s391 = scalar_lea.sflag [#allocation3], 1
  %392 = vsyncmov %s391
  %s393 = vpop.sfrf %392
  %p394 = scmp.eq.s32.totalorder %s393, 0
  %p395 = pneg %p394
  %397 = shalt.err (%p395)
  %s398 = scalar_lea.sflag [#allocation3], 2
  %399 = vsyncmov %s398
  %s400 = vpop.sfrf %399
  %p401 = scmp.eq.s32.totalorder %s400, 0
  %p402 = pneg %p401
  %404 = shalt.err (%p402)
  %s405 = scalar_lea.sflag [#allocation3], 3
  %406 = vsyncmov %s405
  %s407 = vpop.sfrf %406
  %p408 = scmp.eq.s32.totalorder %s407, 0
  %p409 = pneg %p408
  %411 = shalt.err (%p409)
  %s412 = scalar_lea.sflag [#allocation3], 4
  %413 = vsyncmov %s412
  %s414 = vpop.sfrf %413
  %p415 = scmp.eq.s32.totalorder %s414, 0
  %p416 = pneg %p415
  %418 = shalt.err (%p416)
  %s419 = scalar_lea.sflag [#allocation3], 5
  %420 = vsyncmov %s419
  %s421 = vpop.sfrf %420
  %p422 = scmp.eq.s32.totalorder %s421, 0
  %p423 = pneg %p422
  %425 = shalt.err (%p423)
  %s426 = scalar_lea.sflag [#allocation3], 6
  %427 = vsyncmov %s426
  %s428 = vpop.sfrf %427
  %p429 = scmp.eq.s32.totalorder %s428, 0
  %p430 = pneg %p429
  %432 = shalt.err (%p430)
  %s433 = scalar_lea.sflag [#allocation3], 7
  %434 = vsyncmov %s433
  %s435 = vpop.sfrf %434
  %p436 = scmp.eq.s32.totalorder %s435, 0
  %p437 = pneg %p436
  %439 = shalt.err (%p437)

</llo_original>
